<compile_context>
chip_gen: v7x
topology: tpu7x:2x2x1
jax: 0.10.0
libtpu: 0.0.40
codegen_flags: <defaults>
</compile_context>

<pallas_src>
import functools
import math

import jax
import jax.numpy as jnp
from jax.experimental import pallas as pl
from jax.experimental.pallas import tpu as pltpu


_SMALL_BYTES = 256 * 1024             # below this: single-program whole-array path
_VMEM_LIMIT = 32 * 1024 * 1024        # safe on v5e/v6e (128 MiB) and v7x (64 MiB)
_BLOCK_BYTES_TARGET = 2 * 1024 * 1024 # per-block target -> <= 8 MiB double-buffered


# ---------------------------------------------------------------------------
# Kernels
# ---------------------------------------------------------------------------

def _make_full_transpose_kernel(perm):
    """Whole-array transpose for tiny tensors (single grid step)."""
    def kernel(x_ref, o_ref):
        o_ref[...] = jnp.transpose(x_ref[...], perm)
    return kernel


def _swap02_keep_lane_kernel(x_ref, o_ref):
    # (TA, TM, TB, TQ) -> (TB, TM, TA, TQ); lane dim (TQ) preserved -> sublane copies only.
    o_ref[...] = jnp.swapaxes(x_ref[...], 0, 2)


def _swap02_lane_kernel(x_ref, o_ref):
    # (TA, TM, TB) -> (TB, TM, TA); true lane<->sublane transpose per tile (XLU).
    o_ref[...] = jnp.swapaxes(x_ref[...], 0, 2)


def _transpose2d_kernel(x_ref, o_ref):
    # (TA, TB) -> (TB, TA); XLU lane/sublane transpose per tile.
    o_ref[...] = x_ref[...].T


# ---------------------------------------------------------------------------
# Tiling helpers (all static, trace-time Python ints)
# ---------------------------------------------------------------------------

def _pick(dim, align, cap):
    """Tile for `dim`: use the full dim if it fits under `cap`, else an aligned cap."""
    if dim <= cap:
        return dim
    return max(align, (cap // align) * align)


def _sublane(itemsize):
    # Packed dtypes need taller sublane tiles: f32->8, bf16->16, int8/fp8->32.
    return {4: 8, 2: 16, 1: 32}.get(itemsize, 8)


# ---------------------------------------------------------------------------
# Wrapper
# ---------------------------------------------------------------------------

@functools.partial(jax.jit, static_argnames=("dim1", "dim2"))
def trans_pallas(x, dim1, dim2):
    """Pallas equivalent of torch.Tensor.transpose(dim1, dim2)."""
    ndim = x.ndim
    d1 = dim1 % ndim
    d2 = dim2 % ndim
    if d1 == d2:
        return x                              # transpose(d, d) is the identity
    d1, d2 = min(d1, d2), max(d1, d2)

    perm = list(range(ndim))
    perm[d1], perm[d2] = perm[d2], perm[d1]
    perm = tuple(perm)
    out_shape = tuple(x.shape[p] for p in perm)

    itemsize = x.dtype.itemsize
    sub = _sublane(itemsize)

    # ---- tiny tensors: one program, whole arrays resident in VMEM ----------
    if x.size * itemsize <= _SMALL_BYTES:
        return pl.pallas_call(
            _make_full_transpose_kernel(perm),
            out_shape=jax.ShapeDtypeStruct(out_shape, x.dtype),
        )(x)

    # ---- canonical 5-D view: (P, A, M, B, Q), swap A <-> B ------------------
    shape = x.shape
    P = math.prod(shape[:d1])
    A = shape[d1]
    M = math.prod(shape[d1 + 1:d2])
    B = shape[d2]
    Q = math.prod(shape[d2 + 1:])             # collapsed trailing dims = lane axis

    if Q > 1:
        # Swap does not touch the lane axis: tile A, M, B, Q; the lane dim stays
        # dense on both HBM reads and writes.  Budget ~2 MiB per block, giving
        # long contiguous DMA runs along Q and <= 8 MiB double-buffered VMEM.
        budget = max(1, _BLOCK_BYTES_TARGET // itemsize)   # elems per block
        TQ = _pick(Q, 128, min(Q, 2048))                   # keep Q as wide as possible
        rem = max(1, budget // TQ)
        TB = _pick(B, sub, min(128, rem))
        rem = max(1, rem // TB)
        TA = _pick(A, sub, min(64, rem))
        rem = max(1, rem // TA)
        TM = min(M, rem)

        x5 = x.reshape(P, A, M, B, Q)
        grid = (P, pl.cdiv(A, TA), pl.cdiv(M, TM), pl.cdiv(B, TB), pl.cdiv(Q, TQ))
        y5 = pl.pallas_call(
            _swap02_keep_lane_kernel,
            out_shape=jax.ShapeDtypeStruct((P, B, M, A, Q), x.dtype),
            grid_spec=pltpu.PrefetchScalarGridSpec(
                num_scalar_prefetch=0,
                grid=grid,
                in_specs=[pl.BlockSpec((None, TA, TM, TB, TQ),
                                       lambda p, a, m, b, q: (p, a, m, b, q))],
                out_specs=pl.BlockSpec((None, TB, TM, TA, TQ),
                                       lambda p, a, m, b, q: (p, b, m, a, q)),
            ),
            compiler_params=pltpu.CompilerParams(
                dimension_semantics=("parallel",) * len(grid),
                vmem_limit_bytes=_VMEM_LIMIT,
            ),
        )(x5)
        return y5.reshape(out_shape)

    # Q == 1: the swap involves the last (lane) axis -> per-tile lane<->sublane
    # transpose on modest blocks instead of transposing one huge slab.
    if M == 1:
        TA = _pick(A, 128, 512)               # 512 is 8- and 128-aligned (in/out legal)
        TB = _pick(B, 128, 512)
        x3 = x.reshape(P, A, B)
        grid = (P, pl.cdiv(A, TA), pl.cdiv(B, TB))
        y3 = pl.pallas_call(
            _transpose2d_kernel,
            out_shape=jax.ShapeDtypeStruct((P, B, A), x.dtype),
            grid_spec=pltpu.PrefetchScalarGridSpec(
                num_scalar_prefetch=0,
                grid=grid,
                in_specs=[pl.BlockSpec((None, TA, TB),
                                       lambda p, a, b: (p, a, b))],
                out_specs=pl.BlockSpec((None, TB, TA),
                                       lambda p, a, b: (p, b, a)),
            ),
            compiler_params=pltpu.CompilerParams(
                dimension_semantics=("parallel",) * len(grid),
                vmem_limit_bytes=_VMEM_LIMIT,
            ),
        )(x3)
        return y3.reshape(out_shape)

    TA = _pick(A, 128, 256)
    TB = _pick(B, 128, 256)
    TM = min(M, sub)                          # dtype-aware sublane-aligned middle block
    x4 = x.reshape(P, A, M, B)
    grid = (P, pl.cdiv(A, TA), pl.cdiv(M, TM), pl.cdiv(B, TB))
    y4 = pl.pallas_call(
        _swap02_lane_kernel,
        out_shape=jax.ShapeDtypeStruct((P, B, M, A), x.dtype),
        grid_spec=pltpu.PrefetchScalarGridSpec(
            num_scalar_prefetch=0,
            grid=grid,
            in_specs=[pl.BlockSpec((None, TA, TM, TB),
                                   lambda p, a, m, b: (p, a, m, b))],
            out_specs=pl.BlockSpec((None, TB, TM, TA),
                                   lambda p, a, m, b: (p, b, m, a)),
        ),
        compiler_params=pltpu.CompilerParams(
            dimension_semantics=("parallel",) * len(grid),
            vmem_limit_bytes=_VMEM_LIMIT,
        ),
    )(x4)
    return y4.reshape(out_shape)


if __name__ == "__main__":
    key = jax.random.PRNGKey(0)
    k1, k2, k3, k4 = jax.random.split(key, 4)

    # 1) Module instance: trans(dim1=1, dim2=2) on a small NCHW tensor
    #    (takes the single-program whole-array path).
    x1 = jax.random.normal(k1, (2, 4, 16, 16), dtype=jnp.float32)
    out1 = jax.block_until_ready(trans_pallas(x1, dim1=1, dim2=2))
    ref1 = jnp.swapaxes(x1, 1, 2)
    assert out1.shape == ref1.shape and out1.dtype == ref1.dtype
    assert jnp.array_equal(out1, ref1), "small-path transpose mismatch"

    # 2) Larger tensor exercising the tiled, lane-preserving path (Q > 1).
    x2 = jax.random.normal(k2, (2, 128, 64, 128), dtype=jnp.float32)
    out2 = jax.block_until_ready(trans_pallas(x2, dim1=1, dim2=2))
    ref2 = jnp.swapaxes(x2, 1, 2)
    assert out2.shape == ref2.shape
    assert jnp.array_equal(out2, ref2), "tiled (Q>1) transpose mismatch"

    # 3) Swap involving the last (lane) axis, M == 1 -> tiled 2-D lane transpose.
    x3 = jax.random.normal(k3, (4, 128, 256), dtype=jnp.float32)
    out3 = jax.block_until_ready(trans_pallas(x3, dim1=1, dim2=2))
    ref3 = jnp.swapaxes(x3, 1, 2)
    assert out3.shape == ref3.shape
    assert jnp.array_equal(out3, ref3), "tiled lane-transpose mismatch"

    # 4) Swap involving the last axis with a middle dim (M > 1) -> 3-D blocked path.
    x4 = jax.random.normal(k4, (2, 64, 16, 256), dtype=jnp.float32)
    out4 = jax.block_until_ready(trans_pallas(x4, dim1=1, dim2=3))
    ref4 = jnp.swapaxes(x4, 1, 3)
    assert out4.shape == ref4.shape
    assert jnp.array_equal(out4, ref4), "tiled (M>1) lane-transpose mismatch"

    print("KERNEL_OK")
</pallas_src>

<mosaic_0001>
module attributes {stable_mosaic.version = 11 : i64} {
  func.func @kernel(%arg0: memref<2x4x16x16xf32, #tpu.memory_space<vmem>>, %arg1: memref<2x16x4x16xf32, #tpu.memory_space<vmem>>) attributes {dimension_semantics = [], scalar_prefetch = 0 : i64, scratch_operands = 0 : i64, tpu.core_type = #tpu.core_type<tc>} {
    %c0 = arith.constant 0 : index
    %c0_0 = arith.constant 0 : index
    %c0_1 = arith.constant 0 : index
    %c0_2 = arith.constant 0 : index
    %0 = vector.load %arg0[%c0, %c0_0, %c0_1, %c0_2] : memref<2x4x16x16xf32, #tpu.memory_space<vmem>>, vector<2x4x16x16xf32>
    %1 = tpu.transpose %0, [0, 2, 1, 3] : vector<2x4x16x16xf32> -> vector<2x16x4x16xf32>
    %c0_3 = arith.constant 0 : index
    %c0_4 = arith.constant 0 : index
    %c0_5 = arith.constant 0 : index
    %c0_6 = arith.constant 0 : index
    %2 = vector.load %arg1[%c0_3, %c0_4, %c0_5, %c0_6] : memref<2x16x4x16xf32, #tpu.memory_space<vmem>>, vector<2x16x4x16xf32>
    tpu.vector_store %arg1[%c0_3, %c0_4, %c0_5, %c0_6], %1 {strides = array<i32>} : memref<2x16x4x16xf32, #tpu.memory_space<vmem>>, vector<2x16x4x16xf32>,
    return
  }
}

</mosaic_0001>

<llo_original>
// kernel: trans_pallas.1
$region0: #{trans_pallas.1}
  #allocation0 [shape = 'u32[]', space=smem, size = 0x4, offset = 0x4, fixed_abs, tag = 'smem constant byte address 0x4 - core index']
  #allocation1 [shape = 'u32[144,128]{1,0:T(1,128)}', space=vmem, size = 0x12000, scoped, tag = 'internal scratch']
  %s0 = inlined_call_operand.hbm [shape: f32[2,4,16,16], index: 0, kind: input, shape index: {}]
  %s1 = inlined_call_operand.hbm [shape: f32[2,16,4,16], index: 1, kind: output, shape index: {}]
  %s2 = sld [smem:[#allocation0]]
  $region18: #{trans_pallas.1} parent=0
    _
  %s4 = ssub.s32 1, %s2
  %s5 = scalar_select 0, %s4, %s2
  $region1: #{trans_pallas.1} parent=0
    #allocation2 [shape = 'u8[65536]{0}', space=vmem, size = 0x10000, scoped, tag = 'input window, operand 0, single buffered']
    #allocation3 [shape = 's32[1]{0}', space=sflag, size = 0x4, scoped, tag = 'scoped memory for trans_pallas.1']
    #allocation4 [shape = 's32[1]{0}', space=sflag, size = 0x4, scoped, tag = 'scoped memory for trans_pallas.1']
    #allocation5 [shape = 'u8[65536]{0}', space=vmem, size = 0x10000, scoped, tag = 'output window, operand 0, single buffered']
    %6 = vsyncpa [#allocation3], 0
    %7 = vsyncpa [#allocation4], 0
    // Predicated region
    $region2: #{trans_pallas.1} parent=1 // pred_check
      _
    $region3: #{trans_pallas.1} parent=1 // pred_check_branch
      %9 = sbr.rel (0) target = $region5
    $region4: #{trans_pallas.1} parent=1 // pred_region
      %s11 = ssub.s32 2048, 2048
      %12 = vsyncadd [#allocation3], %s11
      %s13 = sshll.u32 [#allocation2], 4
      %s14 = int_to_ptr.vmem [resolvable:$true] %s13
      %19 = dma.hbm_to_vmem [thread:$0]  %s0, 2048, %s14, [#allocation3], 128, 128, 8
    $region5: #{trans_pallas.1} parent=1 // pred_fallthru
      _
    // Predicated region
    $region6: #{trans_pallas.1} parent=1 // pred_check
      _
    $region7: #{trans_pallas.1} parent=1 // pred_check_branch
      %21 = sbr.rel (0) target = $region9
    $region8: #{trans_pallas.1} parent=1 // pred_region
      %22 = dma.done [#allocation3], 2048
    $region9: #{trans_pallas.1} parent=1 // pred_fallthru
      _
    %v23 = vld [vmem:[#allocation2] sm:$0xff]
    %v24 = vld [vmem:[#allocation2 + $0x8] sm:$0xff]
    %v25 = vld [vmem:[#allocation2 + $0x10] sm:$0xff]
    %v26 = vld [vmem:[#allocation2 + $0x18] sm:$0xff]
    %v27 = vld [vmem:[#allocation2 + $0x20] sm:$0xff]
    %v28 = vld [vmem:[#allocation2 + $0x28] sm:$0xff]
    %v29 = vld [vmem:[#allocation2 + $0x30] sm:$0xff]
    %v30 = vld [vmem:[#allocation2 + $0x38] sm:$0xff]
    %v31 = vld [vmem:[#allocation2 + $0x40] sm:$0xff]
    %v32 = vld [vmem:[#allocation2 + $0x48] sm:$0xff]
    %v33 = vld [vmem:[#allocation2 + $0x50] sm:$0xff]
    %v34 = vld [vmem:[#allocation2 + $0x58] sm:$0xff]
    %v35 = vld [vmem:[#allocation2 + $0x60] sm:$0xff]
    %v36 = vld [vmem:[#allocation2 + $0x68] sm:$0xff]
    %v37 = vld [vmem:[#allocation2 + $0x70] sm:$0xff]
    %v38 = vld [vmem:[#allocation2 + $0x78] sm:$0xff]
    %v39 = vcombine.low %v23, %v27
    %v40 = vcombine.high %v23, %v27
    %v42 = vunpack.c.l.s4 1983009808
    %v43 = vunpack.c.0.s8 %v42
    %v44 = vlaneseq
    %v45 = vshrl.u32 %v44, 7
    %v46 = vsub.s32 %v43, %v45
    %v47 = vrot.slane %v39, %v46
    %v49 = vunpack.c.l.s4 1983009808
    %v50 = vunpack.c.0.s8 %v49
    %v51 = vlaneseq
    %v52 = vshrl.u32 %v51, 7
    %v53 = vsub.s32 %v50, %v52
    %v54 = vrot.slane %v40, %v53
    %v55 = vcombine.low %v25, %v29
    %v56 = vcombine.high %v25, %v29
    %v58 = vunpack.c.l.s4 1983009808
    %v59 = vunpack.c.0.s8 %v58
    %v60 = vlaneseq
    %v61 = vshrl.u32 %v60, 7
    %v62 = vsub.s32 %v59, %v61
    %v63 = vrot.slane %v55, %v62
    %v65 = vunpack.c.l.s4 1983009808
    %v66 = vunpack.c.0.s8 %v65
    %v67 = vlaneseq
    %v68 = vshrl.u32 %v67, 7
    %v69 = vsub.s32 %v66, %v68
    %v70 = vrot.slane %v56, %v69
    %v71 = vcombine.low %v47, %v63
    %v72 = vcombine.high %v47, %v63
    %v74 = vunpack.c.l.s4 1934713408
    %v75 = vunpack.c.0.s8 %v74
    %v76 = vlaneseq
    %v77 = vshrl.u32 %v76, 7
    %v78 = vsub.s32 %v75, %v77
    %v79 = vrot.slane %v71, %v78
    %v81 = vunpack.c.l.s4 1934713408
    %v82 = vunpack.c.0.s8 %v81
    %v83 = vlaneseq
    %v84 = vshrl.u32 %v83, 7
    %v85 = vsub.s32 %v82, %v84
    %v86 = vrot.slane %v72, %v85
    %v87 = vcombine.low %v54, %v70
    %v88 = vcombine.high %v54, %v70
    %v90 = vunpack.c.l.s4 1934713408
    %v91 = vunpack.c.0.s8 %v90
    %v92 = vlaneseq
    %v93 = vshrl.u32 %v92, 7
    %v94 = vsub.s32 %v91, %v93
    %v95 = vrot.slane %v87, %v94
    %v97 = vunpack.c.l.s4 1934713408
    %v98 = vunpack.c.0.s8 %v97
    %v99 = vlaneseq
    %v100 = vshrl.u32 %v99, 7
    %v101 = vsub.s32 %v98, %v100
    %v102 = vrot.slane %v88, %v101
    %v103 = vcombine.high %v79, 0.0
    %v104 = vcombine.high %v86, 0.0
    %v105 = vcombine.high %v95, 0.0
    %v106 = vcombine.high %v102, 0.0
    %v107 = vcombine.low %v24, %v28
    %v108 = vcombine.high %v24, %v28
    %v110 = vunpack.c.l.s4 1983009808
    %v111 = vunpack.c.0.s8 %v110
    %v112 = vlaneseq
    %v113 = vshrl.u32 %v112, 7
    %v114 = vsub.s32 %v111, %v113
    %v115 = vrot.slane %v107, %v114
    %v117 = vunpack.c.l.s4 1983009808
    %v118 = vunpack.c.0.s8 %v117
    %v119 = vlaneseq
    %v120 = vshrl.u32 %v119, 7
    %v121 = vsub.s32 %v118, %v120
    %v122 = vrot.slane %v108, %v121
    %v123 = vcombine.low %v26, %v30
    %v124 = vcombine.high %v26, %v30
    %v126 = vunpack.c.l.s4 1983009808
    %v127 = vunpack.c.0.s8 %v126
    %v128 = vlaneseq
    %v129 = vshrl.u32 %v128, 7
    %v130 = vsub.s32 %v127, %v129
    %v131 = vrot.slane %v123, %v130
    %v133 = vunpack.c.l.s4 1983009808
    %v134 = vunpack.c.0.s8 %v133
    %v135 = vlaneseq
    %v136 = vshrl.u32 %v135, 7
    %v137 = vsub.s32 %v134, %v136
    %v138 = vrot.slane %v124, %v137
    %v139 = vcombine.low %v115, %v131
    %v140 = vcombine.high %v115, %v131
    %v142 = vunpack.c.l.s4 1934713408
    %v143 = vunpack.c.0.s8 %v142
    %v144 = vlaneseq
    %v145 = vshrl.u32 %v144, 7
    %v146 = vsub.s32 %v143, %v145
    %v147 = vrot.slane %v139, %v146
    %v149 = vunpack.c.l.s4 1934713408
    %v150 = vunpack.c.0.s8 %v149
    %v151 = vlaneseq
    %v152 = vshrl.u32 %v151, 7
    %v153 = vsub.s32 %v150, %v152
    %v154 = vrot.slane %v140, %v153
    %v155 = vcombine.low %v122, %v138
    %v156 = vcombine.high %v122, %v138
    %v158 = vunpack.c.l.s4 1934713408
    %v159 = vunpack.c.0.s8 %v158
    %v160 = vlaneseq
    %v161 = vshrl.u32 %v160, 7
    %v162 = vsub.s32 %v159, %v161
    %v163 = vrot.slane %v155, %v162
    %v165 = vunpack.c.l.s4 1934713408
    %v166 = vunpack.c.0.s8 %v165
    %v167 = vlaneseq
    %v168 = vshrl.u32 %v167, 7
    %v169 = vsub.s32 %v166, %v168
    %v170 = vrot.slane %v156, %v169
    %v171 = vcombine.high %v147, 0.0
    %v172 = vcombine.high %v154, 0.0
    %v173 = vcombine.high %v163, 0.0
    %v174 = vcombine.high %v170, 0.0
    %v175 = vcombine.low %v31, %v35
    %v176 = vcombine.high %v31, %v35
    %v178 = vunpack.c.l.s4 1983009808
    %v179 = vunpack.c.0.s8 %v178
    %v180 = vlaneseq
    %v181 = vshrl.u32 %v180, 7
    %v182 = vsub.s32 %v179, %v181
    %v183 = vrot.slane %v175, %v182
    %v185 = vunpack.c.l.s4 1983009808
    %v186 = vunpack.c.0.s8 %v185
    %v187 = vlaneseq
    %v188 = vshrl.u32 %v187, 7
    %v189 = vsub.s32 %v186, %v188
    %v190 = vrot.slane %v176, %v189
    %v191 = vcombine.low %v33, %v37
    %v192 = vcombine.high %v33, %v37
    %v194 = vunpack.c.l.s4 1983009808
    %v195 = vunpack.c.0.s8 %v194
    %v196 = vlaneseq
    %v197 = vshrl.u32 %v196, 7
    %v198 = vsub.s32 %v195, %v197
    %v199 = vrot.slane %v191, %v198
    %v201 = vunpack.c.l.s4 1983009808
    %v202 = vunpack.c.0.s8 %v201
    %v203 = vlaneseq
    %v204 = vshrl.u32 %v203, 7
    %v205 = vsub.s32 %v202, %v204
    %v206 = vrot.slane %v192, %v205
    %v207 = vcombine.low %v183, %v199
    %v208 = vcombine.high %v183, %v199
    %v210 = vunpack.c.l.s4 1934713408
    %v211 = vunpack.c.0.s8 %v210
    %v212 = vlaneseq
    %v213 = vshrl.u32 %v212, 7
    %v214 = vsub.s32 %v211, %v213
    %v215 = vrot.slane %v207, %v214
    %v217 = vunpack.c.l.s4 1934713408
    %v218 = vunpack.c.0.s8 %v217
    %v219 = vlaneseq
    %v220 = vshrl.u32 %v219, 7
    %v221 = vsub.s32 %v218, %v220
    %v222 = vrot.slane %v208, %v221
    %v223 = vcombine.low %v190, %v206
    %v224 = vcombine.high %v190, %v206
    %v226 = vunpack.c.l.s4 1934713408
    %v227 = vunpack.c.0.s8 %v226
    %v228 = vlaneseq
    %v229 = vshrl.u32 %v228, 7
    %v230 = vsub.s32 %v227, %v229
    %v231 = vrot.slane %v223, %v230
    %v233 = vunpack.c.l.s4 1934713408
    %v234 = vunpack.c.0.s8 %v233
    %v235 = vlaneseq
    %v236 = vshrl.u32 %v235, 7
    %v237 = vsub.s32 %v234, %v236
    %v238 = vrot.slane %v224, %v237
    %v239 = vcombine.high %v215, 0.0
    %v240 = vcombine.high %v222, 0.0
    %v241 = vcombine.high %v231, 0.0
    %v242 = vcombine.high %v238, 0.0
    %v243 = vcombine.low %v32, %v36
    %v244 = vcombine.high %v32, %v36
    %v246 = vunpack.c.l.s4 1983009808
    %v247 = vunpack.c.0.s8 %v246
    %v248 = vlaneseq
    %v249 = vshrl.u32 %v248, 7
    %v250 = vsub.s32 %v247, %v249
    %v251 = vrot.slane %v243, %v250
    %v253 = vunpack.c.l.s4 1983009808
    %v254 = vunpack.c.0.s8 %v253
    %v255 = vlaneseq
    %v256 = vshrl.u32 %v255, 7
    %v257 = vsub.s32 %v254, %v256
    %v258 = vrot.slane %v244, %v257
    %v259 = vcombine.low %v34, %v38
    %v260 = vcombine.high %v34, %v38
    %v262 = vunpack.c.l.s4 1983009808
    %v263 = vunpack.c.0.s8 %v262
    %v264 = vlaneseq
    %v265 = vshrl.u32 %v264, 7
    %v266 = vsub.s32 %v263, %v265
    %v267 = vrot.slane %v259, %v266
    %v269 = vunpack.c.l.s4 1983009808
    %v270 = vunpack.c.0.s8 %v269
    %v271 = vlaneseq
    %v272 = vshrl.u32 %v271, 7
    %v273 = vsub.s32 %v270, %v272
    %v274 = vrot.slane %v260, %v273
    %v275 = vcombine.low %v251, %v267
    %v276 = vcombine.high %v251, %v267
    %v278 = vunpack.c.l.s4 1934713408
    %v279 = vunpack.c.0.s8 %v278
    %v280 = vlaneseq
    %v281 = vshrl.u32 %v280, 7
    %v282 = vsub.s32 %v279, %v281
    %v283 = vrot.slane %v275, %v282
    %v285 = vunpack.c.l.s4 1934713408
    %v286 = vunpack.c.0.s8 %v285
    %v287 = vlaneseq
    %v288 = vshrl.u32 %v287, 7
    %v289 = vsub.s32 %v286, %v288
    %v290 = vrot.slane %v276, %v289
    %v291 = vcombine.low %v258, %v274
    %v292 = vcombine.high %v258, %v274
    %v294 = vunpack.c.l.s4 1934713408
    %v295 = vunpack.c.0.s8 %v294
    %v296 = vlaneseq
    %v297 = vshrl.u32 %v296, 7
    %v298 = vsub.s32 %v295, %v297
    %v299 = vrot.slane %v291, %v298
    %v301 = vunpack.c.l.s4 1934713408
    %v302 = vunpack.c.0.s8 %v301
    %v303 = vlaneseq
    %v304 = vshrl.u32 %v303, 7
    %v305 = vsub.s32 %v302, %v304
    %v306 = vrot.slane %v292, %v305
    %v307 = vcombine.high %v283, 0.0
    %v308 = vcombine.high %v290, 0.0
    %v309 = vcombine.high %v299, 0.0
    %v310 = vcombine.high %v306, 0.0
    %vm311 = vcmask 125952
    %312 = vst.msk [vmem:[#allocation5] sm:$0xf] %vm311, %v79
    %313 = vst.msk [vmem:[#allocation5 + $0x4] sm:$0xf] %vm311, %v103
    %314 = vst.msk [vmem:[#allocation5 + $0x8] sm:$0xf] %vm311, %v86
    %315 = vst.msk [vmem:[#allocation5 + $0xc] sm:$0xf] %vm311, %v104
    %316 = vst.msk [vmem:[#allocation5 + $0x10] sm:$0xf] %vm311, %v95
    %317 = vst.msk [vmem:[#allocation5 + $0x14] sm:$0xf] %vm311, %v105
    %318 = vst.msk [vmem:[#allocation5 + $0x18] sm:$0xf] %vm311, %v102
    %319 = vst.msk [vmem:[#allocation5 + $0x1c] sm:$0xf] %vm311, %v106
    %320 = vst.msk [vmem:[#allocation5 + $0x20] sm:$0xf] %vm311, %v147
    %321 = vst.msk [vmem:[#allocation5 + $0x24] sm:$0xf] %vm311, %v171
    %322 = vst.msk [vmem:[#allocation5 + $0x28] sm:$0xf] %vm311, %v154
    %323 = vst.msk [vmem:[#allocation5 + $0x2c] sm:$0xf] %vm311, %v172
    %324 = vst.msk [vmem:[#allocation5 + $0x30] sm:$0xf] %vm311, %v163
    %325 = vst.msk [vmem:[#allocation5 + $0x34] sm:$0xf] %vm311, %v173
    %326 = vst.msk [vmem:[#allocation5 + $0x38] sm:$0xf] %vm311, %v170
    %327 = vst.msk [vmem:[#allocation5 + $0x3c] sm:$0xf] %vm311, %v174
    %328 = vst.msk [vmem:[#allocation5 + $0x40] sm:$0xf] %vm311, %v215
    %329 = vst.msk [vmem:[#allocation5 + $0x44] sm:$0xf] %vm311, %v239
    %330 = vst.msk [vmem:[#allocation5 + $0x48] sm:$0xf] %vm311, %v222
    %331 = vst.msk [vmem:[#allocation5 + $0x4c] sm:$0xf] %vm311, %v240
    %332 = vst.msk [vmem:[#allocation5 + $0x50] sm:$0xf] %vm311, %v231
    %333 = vst.msk [vmem:[#allocation5 + $0x54] sm:$0xf] %vm311, %v241
    %334 = vst.msk [vmem:[#allocation5 + $0x58] sm:$0xf] %vm311, %v238
    %335 = vst.msk [vmem:[#allocation5 + $0x5c] sm:$0xf] %vm311, %v242
    %336 = vst.msk [vmem:[#allocation5 + $0x60] sm:$0xf] %vm311, %v283
    %337 = vst.msk [vmem:[#allocation5 + $0x64] sm:$0xf] %vm311, %v307
    %338 = vst.msk [vmem:[#allocation5 + $0x68] sm:$0xf] %vm311, %v290
    %339 = vst.msk [vmem:[#allocation5 + $0x6c] sm:$0xf] %vm311, %v308
    %340 = vst.msk [vmem:[#allocation5 + $0x70] sm:$0xf] %vm311, %v299
    %341 = vst.msk [vmem:[#allocation5 + $0x74] sm:$0xf] %vm311, %v309
    %342 = vst.msk [vmem:[#allocation5 + $0x78] sm:$0xf] %vm311, %v306
    %343 = vst.msk [vmem:[#allocation5 + $0x7c] sm:$0xf] %vm311, %v310
    // Predicated region
    $region10: #{trans_pallas.1} parent=1 // pred_check
      _
    $region11: #{trans_pallas.1} parent=1 // pred_check_branch
      %345 = sbr.rel (0) target = $region13
    $region12: #{trans_pallas.1} parent=1 // pred_region
      %s347 = ssub.s32 2048, 2048
      %348 = vsyncadd [#allocation4], %s347
      %s349 = sshll.u32 [#allocation5], 4
      %s350 = int_to_ptr.vmem [resolvable:$true] %s349
      %355 = dma.vmem_to_hbm [thread:$0]  %s350, 2048, %s1, [#allocation4], 64, 64, 4
    $region13: #{trans_pallas.1} parent=1 // pred_fallthru
      _
    // Predicated region
    $region14: #{trans_pallas.1} parent=1 // pred_check
      _
    $region15: #{trans_pallas.1} parent=1 // pred_check_branch
      %357 = sbr.rel (0) target = $region17
    $region16: #{trans_pallas.1} parent=1 // pred_region
      %358 = dma.done [#allocation4], 2048
    $region17: #{trans_pallas.1} parent=1 // pred_fallthru
      _
    %359 = vsyncpa [#allocation3], 1
    %360 = vsyncpa [#allocation4], 1

</llo_original>
